<compile_context>
chip_gen: v7x
topology: tpu7x:2x2x1
jax: 0.10.0
libtpu: 0.0.40
codegen_flags: <defaults>
</compile_context>

<pallas_src>
import functools

import jax
import jax.numpy as jnp
from jax.experimental import pallas as pl
from jax.experimental.pallas import tpu as pltpu

REPARAM_NOISE = 1e-6


def _round_up(x, m):
    return (x + m - 1) // m * m


# --------------------------------------------------------------------------
# Parameter packing (done once, outside the kernel / hot path)
# --------------------------------------------------------------------------
def init_params(key, input_dim, fc1_dims, fc2_dims, action_dim):
    """PyTorch-style uniform(-1/sqrt(fan_in), 1/sqrt(fan_in)) linear init.

    Weights are stored as (in_features, out_features) (transposed vs
    nn.Linear.weight), biases as (1, out_features).
    """
    def linear(k, fan_in, fan_out):
        kw, kb = jax.random.split(k)
        bound = 1.0 / jnp.sqrt(fan_in)
        w = jax.random.uniform(kw, (fan_in, fan_out), jnp.float32, -bound, bound)
        b = jax.random.uniform(kb, (1, fan_out), jnp.float32, -bound, bound)
        return w, b

    k1, k2, k3, k4 = jax.random.split(key, 4)
    w1, b1 = linear(k1, input_dim, fc1_dims)
    w2, b2 = linear(k2, fc1_dims, fc2_dims)
    wmu, bmu = linear(k3, fc2_dims, action_dim)
    wsig, bsig = linear(k4, fc2_dims, action_dim)
    return (w1, b1, w2, b2, wmu, bmu, wsig, bsig)


def pack_params(params):
    """Pack all weights/biases into one contiguous f32 slab (single DMA).

    mu/sigma head weights are concatenated into one (FC2, 2*ACT) weight so the
    kernel does a single fused head matmul.  Each segment starts on an 8-row
    boundary so in-kernel loads are sublane-aligned.
    """
    w1, b1, w2, b2, wmu, bmu, wsig, bsig = params
    IN, FC1 = w1.shape
    FC2 = w2.shape[1]
    ACT = wmu.shape[1]

    wh = jnp.concatenate([wmu, wsig], axis=1)   # (FC2, 2*ACT)
    bh = jnp.concatenate([bmu, bsig], axis=1)   # (1,   2*ACT)

    width = max(FC1, FC2, 2 * ACT)
    segs, offs, row = [], {}, 0
    for name, arr in (("w1", w1), ("b1", b1), ("w2", w2), ("b2", b2),
                      ("wh", wh), ("bh", bh)):
        offs[name] = row
        segs.append((row, arr))
        row = _round_up(row + arr.shape[0], 8)
    total_rows = _round_up(row, 8)

    slab = jnp.zeros((total_rows, width), jnp.float32)
    for r0, arr in segs:
        slab = slab.at[r0:r0 + arr.shape[0], :arr.shape[1]].set(
            arr.astype(jnp.float32))

    layout = dict(IN=IN, FC1=FC1, FC2=FC2, ACT=ACT, offs=offs)
    return slab, layout


# --------------------------------------------------------------------------
# Kernel
# --------------------------------------------------------------------------
def _make_actor_kernel(IN, FC1, FC2, ACT, offs, matmul_dtype):
    r_w1, r_b1 = offs["w1"], offs["b1"]
    r_w2, r_b2 = offs["w2"], offs["b2"]
    r_wh, r_bh = offs["wh"], offs["bh"]
    H = 2 * ACT

    def kernel(x_ref, p_ref, out_ref):
        cast = lambda a: a.astype(matmul_dtype)

        # Static, sublane-aligned slices out of the single packed param slab.
        w1 = p_ref[r_w1:r_w1 + IN, 0:FC1]
        b1 = p_ref[r_b1:r_b1 + 1, 0:FC1]
        w2 = p_ref[r_w2:r_w2 + FC1, 0:FC2]
        b2 = p_ref[r_b2:r_b2 + 1, 0:FC2]
        wh = p_ref[r_wh:r_wh + FC2, 0:H]
        bh = p_ref[r_bh:r_bh + 1, 0:H]

        x = x_ref[...]

        # fc1 + relu   (bf16 MXU operands, f32 accumulate + f32 elementwise)
        h1 = jnp.dot(cast(x), cast(w1), preferred_element_type=jnp.float32)
        h1 = jnp.maximum(h1 + b1, 0.0)

        # fc2 + relu
        h2 = jnp.dot(cast(h1), cast(w2), preferred_element_type=jnp.float32)
        h2 = jnp.maximum(h2 + b2, 0.0)

        # fused [mu | sigma] head: one matmul, one lane-packed store
        heads = jnp.dot(cast(h2), cast(wh), preferred_element_type=jnp.float32)
        heads = heads + bh

        col = jax.lax.broadcasted_iota(jnp.int32, heads.shape, 1)
        clipped = jnp.clip(heads, REPARAM_NOISE, 1.0)   # sigma = clamp(., 1e-6, 1)
        out = jnp.where(col < ACT, heads, clipped)      # mu lanes untouched
        out_ref[...] = out.astype(out_ref.dtype)

    return kernel


# --------------------------------------------------------------------------
# Wrapper
# --------------------------------------------------------------------------
def actor_forward(state, packed_params, layout, *,
                  matmul_dtype=jnp.bfloat16, batch_block=256):
    """Fused ActorNetwork forward. Returns (mu, sigma)."""
    IN, FC1, FC2, ACT = (layout["IN"], layout["FC1"],
                         layout["FC2"], layout["ACT"])
    offs = layout["offs"]
    B = state.shape[0]
    H = 2 * ACT

    bb = B if B <= batch_block else batch_block
    nb = pl.cdiv(B, bb)

    kernel = _make_actor_kernel(IN, FC1, FC2, ACT, offs, matmul_dtype)

    flops = 2 * B * (IN * FC1 + FC1 * FC2 + FC2 * H)
    bytes_accessed = 4 * (state.size + packed_params.size + B * H)

    out = pl.pallas_call(
        kernel,
        out_shape=jax.ShapeDtypeStruct((B, H), jnp.float32),
        grid=(nb,),
        in_specs=[
            pl.BlockSpec((bb, IN), lambda i: (i, 0)),
            # Weight slab: one DMA, pinned resident across batch blocks.
            pl.BlockSpec(packed_params.shape, lambda i: (0, 0)),
        ],
        out_specs=pl.BlockSpec((bb, H), lambda i: (i, 0)),
        compiler_params=pltpu.CompilerParams(
            dimension_semantics=("parallel",)),
        cost_estimate=pl.CostEstimate(
            flops=flops, transcendentals=0, bytes_accessed=bytes_accessed),
    )(state, packed_params)

    mu = out[:, :ACT]
    sigma = out[:, ACT:]
    return mu, sigma


# --------------------------------------------------------------------------
# Pure-JAX reference (mirrors the kernel's matmul dtype for a tight check)
# --------------------------------------------------------------------------
def actor_forward_ref(state, params, matmul_dtype=jnp.bfloat16):
    w1, b1, w2, b2, wmu, bmu, wsig, bsig = params
    c = lambda a: a.astype(matmul_dtype)
    h1 = jnp.maximum(
        jnp.dot(c(state), c(w1), preferred_element_type=jnp.float32) + b1, 0.0)
    h2 = jnp.maximum(
        jnp.dot(c(h1), c(w2), preferred_element_type=jnp.float32) + b2, 0.0)
    mu = jnp.dot(c(h2), c(wmu), preferred_element_type=jnp.float32) + bmu
    sig = jnp.dot(c(h2), c(wsig), preferred_element_type=jnp.float32) + bsig
    sigma = jnp.clip(sig, REPARAM_NOISE, 1.0)
    return mu, sigma


if __name__ == "__main__":
    # Small shapes consistent with the module: input_dims=(8,), fc1=32, fc2=32,
    # action_dim=4, batch=8.
    B, INPUT_DIM, FC1, FC2, ACT = 8, 8, 32, 32, 4

    key = jax.random.PRNGKey(0)
    k_state, k_params = jax.random.split(key)
    state = jax.random.normal(k_state, (B, INPUT_DIM), dtype=jnp.float32)
    params = init_params(k_params, INPUT_DIM, FC1, FC2, ACT)

    # Pack once (outside the hot path): one contiguous param slab + layout.
    slab, layout = pack_params(params)

    mu, sigma = actor_forward(state, slab, layout)
    jax.block_until_ready((mu, sigma))

    # Sanity check against pure-JAX reference (same bf16-operand compute path).
    mu_ref, sigma_ref = actor_forward_ref(state, params)
    assert mu.shape == (B, ACT) and sigma.shape == (B, ACT)
    assert jnp.allclose(mu, mu_ref, atol=1e-2, rtol=1e-2)
    assert jnp.allclose(sigma, sigma_ref, atol=1e-2, rtol=1e-2)
    # Clamp bounds: compare in float32 (the clamp low bound is float32(1e-6),
    # which is slightly below the python double literal 1e-6).
    assert bool(jnp.all(sigma >= jnp.float32(REPARAM_NOISE)))
    assert bool(jnp.all(sigma <= jnp.float32(1.0)))

    print("KERNEL_OK")
</pallas_src>

<mosaic_0001>
module attributes {stable_mosaic.version = 11 : i64} {
  func.func @kernel(%arg0: i32, %arg1: memref<8x8xf32, #tpu.memory_space<vmem>>, %arg2: memref<96x32xf32, #tpu.memory_space<vmem>>, %arg3: memref<8x8xf32, #tpu.memory_space<vmem>>) attributes {dimension_semantics = [#tpu.dimension_semantics<parallel>], iteration_bounds = array<i64: 1>, scalar_prefetch = 0 : i64, scratch_operands = 0 : i64, tpu.core_type = #tpu.core_type<tc>, window_params = [{transform_indices = @transform_0, window_bounds = array<i64: 8, 8>}, {pipeline_mode = #tpu.pipeline_mode<synchronous>, transform_indices = @transform_1, window_bounds = array<i64: 96, 32>}, {transform_indices = @transform_2, window_bounds = array<i64: 8, 8>}]} {
    %c0 = arith.constant 0 : index
    %c0_0 = arith.constant 0 : index
    %0 = vector.load %arg2[%c0, %c0_0] : memref<96x32xf32, #tpu.memory_space<vmem>>, vector<8x32xf32>
    %c8 = arith.constant 8 : index
    %c0_1 = arith.constant 0 : index
    %1 = vector.load %arg2[%c8, %c0_1] : memref<96x32xf32, #tpu.memory_space<vmem>>, vector<1x32xf32>
    %c16 = arith.constant 16 : index
    %c0_2 = arith.constant 0 : index
    %2 = vector.load %arg2[%c16, %c0_2] : memref<96x32xf32, #tpu.memory_space<vmem>>, vector<32x32xf32>
    %c48 = arith.constant 48 : index
    %c0_3 = arith.constant 0 : index
    %3 = vector.load %arg2[%c48, %c0_3] : memref<96x32xf32, #tpu.memory_space<vmem>>, vector<1x32xf32>
    %c56 = arith.constant 56 : index
    %c0_4 = arith.constant 0 : index
    %4 = vector.load %arg2[%c56, %c0_4] : memref<96x32xf32, #tpu.memory_space<vmem>>, vector<32x8xf32>
    %c88 = arith.constant 88 : index
    %c0_5 = arith.constant 0 : index
    %5 = vector.load %arg2[%c88, %c0_5] : memref<96x32xf32, #tpu.memory_space<vmem>>, vector<1x8xf32>
    %c0_6 = arith.constant 0 : index
    %c0_7 = arith.constant 0 : index
    %6 = vector.load %arg1[%c0_6, %c0_7] : memref<8x8xf32, #tpu.memory_space<vmem>>, vector<8x8xf32>
    %7 = arith.truncf %6 : vector<8x8xf32> to vector<8x8xbf16>
    %8 = arith.truncf %0 : vector<8x32xf32> to vector<8x32xbf16>
    %cst = arith.constant dense<0.000000e+00> : vector<8x32xf32>
    %9 = tpu.matmul %7, %8, %cst {dimension_numbers = #tpu.dot_dimension_numbers<[1], [0], [0], [1], [0, 0, 1, 1], [], []>} : vector<8x8xbf16>, vector<8x32xbf16>, vector<8x32xf32> -> vector<8x32xf32>
    %10 = vector.broadcast %1 : vector<1x32xf32> to vector<8x32xf32>
    %11 = arith.addf %9, %10 : vector<8x32xf32>
    %cst_8 = arith.constant 0.000000e+00 : f32
    %12 = vector.broadcast %cst_8 : f32 to vector<8x32xf32>
    %13 = arith.maximumf %11, %12 : vector<8x32xf32>
    %14 = arith.truncf %13 : vector<8x32xf32> to vector<8x32xbf16>
    %15 = arith.truncf %2 : vector<32x32xf32> to vector<32x32xbf16>
    %cst_9 = arith.constant dense<0.000000e+00> : vector<8x32xf32>
    %16 = tpu.matmul %14, %15, %cst_9 {dimension_numbers = #tpu.dot_dimension_numbers<[1], [0], [0], [1], [0, 0, 1, 1], [], []>} : vector<8x32xbf16>, vector<32x32xbf16>, vector<8x32xf32> -> vector<8x32xf32>
    %17 = vector.broadcast %3 : vector<1x32xf32> to vector<8x32xf32>
    %18 = arith.addf %16, %17 : vector<8x32xf32>
    %cst_10 = arith.constant 0.000000e+00 : f32
    %19 = vector.broadcast %cst_10 : f32 to vector<8x32xf32>
    %20 = arith.maximumf %18, %19 : vector<8x32xf32>
    %21 = arith.truncf %20 : vector<8x32xf32> to vector<8x32xbf16>
    %22 = arith.truncf %4 : vector<32x8xf32> to vector<32x8xbf16>
    %cst_11 = arith.constant dense<0.000000e+00> : vector<8x8xf32>
    %23 = tpu.matmul %21, %22, %cst_11 {dimension_numbers = #tpu.dot_dimension_numbers<[1], [0], [0], [1], [0, 0, 1, 1], [], []>} : vector<8x32xbf16>, vector<32x8xbf16>, vector<8x8xf32> -> vector<8x8xf32>
    %24 = vector.broadcast %5 : vector<1x8xf32> to vector<8x8xf32>
    %25 = arith.addf %23, %24 : vector<8x8xf32>
    %26 = tpu.iota {dimensions = array<i32: 1>} : vector<8x8xi32>
    %cst_12 = arith.constant 9.99999997E-7 : f32
    %cst_13 = arith.constant 1.000000e+00 : f32
    %27 = vector.broadcast %cst_12 : f32 to vector<8x8xf32>
    %28 = arith.maximumf %27, %25 : vector<8x8xf32>
    %29 = vector.broadcast %cst_13 : f32 to vector<8x8xf32>
    %30 = arith.minimumf %29, %28 : vector<8x8xf32>
    %c4_i32 = arith.constant 4 : i32
    %31 = vector.broadcast %c4_i32 : i32 to vector<8x8xi32>
    %32 = arith.cmpi slt, %26, %31 : vector<8x8xi32>
    %33 = arith.select %32, %25, %30 : vector<8x8xi1>, vector<8x8xf32>
    %c0_14 = arith.constant 0 : index
    %c0_15 = arith.constant 0 : index
    %34 = vector.load %arg3[%c0_14, %c0_15] : memref<8x8xf32, #tpu.memory_space<vmem>>, vector<8x8xf32>
    tpu.vector_store %arg3[%c0_14, %c0_15], %33 {strides = array<i32>} : memref<8x8xf32, #tpu.memory_space<vmem>>, vector<8x8xf32>,
    return
  }
  func.func @transform_0(%arg0: i32) -> (i32, i32) {
    %c0_i32 = arith.constant 0 : i32
    %c0_i32_0 = arith.constant 0 : i32
    return %arg0, %c0_i32 : i32, i32
  }
  func.func @transform_1(%arg0: i32) -> (i32, i32) {
    %c0_i32 = arith.constant 0 : i32
    %c0_i32_0 = arith.constant 0 : i32
    %c0_i32_1 = arith.constant 0 : i32
    return %c0_i32, %c0_i32_0 : i32, i32
  }
  func.func @transform_2(%arg0: i32) -> (i32, i32) {
    %c0_i32 = arith.constant 0 : i32
    %c0_i32_0 = arith.constant 0 : i32
    return %arg0, %c0_i32 : i32, i32
  }
}

</mosaic_0001>

<llo_original>
// kernel: tpu_custom_call.1
$region0: #{tpu_custom_call.1}
  #allocation0 [shape = 'u32[]', space=smem, size = 0x4, offset = 0x4, fixed_abs, tag = 'smem constant byte address 0x4 - core index']
  #allocation1 [shape = 'u32[144,128]{1,0:T(1,128)}', space=vmem, size = 0x12000, scoped, tag = 'internal scratch']
  %s0 = inlined_call_operand.vmem [shape: f32[8,8], index: 0, kind: input, shape index: {}]
  %s1 = inlined_call_operand.vmem [shape: f32[96,32], index: 1, kind: input, shape index: {}]
  %s2 = inlined_call_operand.hbm [shape: f32[8,8], index: 2, kind: output, shape index: {}]
  %s3 = sld [smem:[#allocation0]]
  $region18: #{tpu_custom_call.1} parent=0
    _
  %s5 = ssub.s32 1, %s3
  %s6 = scalar_select 0, %s5, %s3
  $region1: #{tpu_custom_call.1} parent=0
    #allocation2 [shape = 'u8[4096]{0}', space=vmem, size = 0x1000, scoped, tag = 'output window, operand 0, single buffered']
    #allocation3 [shape = 's32[1]{0}', space=sflag, size = 0x4, scoped, tag = 'scoped memory for tpu_custom_call.1']
    %7 = vsyncpa [#allocation3], 0
    // Predicated region
    $region2: #{tpu_custom_call.1} parent=1 // pred_check
      _
    $region3: #{tpu_custom_call.1} parent=1 // pred_check_branch
      %9 = sbr.rel (0) target = $region5
    $region4: #{tpu_custom_call.1} parent=1 // pred_region
      _
    $region5: #{tpu_custom_call.1} parent=1 // pred_fallthru
      _
    // Predicated region
    $region6: #{tpu_custom_call.1} parent=1 // pred_check
      _
    $region7: #{tpu_custom_call.1} parent=1 // pred_check_branch
      %11 = sbr.rel (0) target = $region9
    $region8: #{tpu_custom_call.1} parent=1 // pred_region
      _
    $region9: #{tpu_custom_call.1} parent=1 // pred_fallthru
      _
    %v13 = vld [vmem:[%s1] sm:$0xff]
    %v14 = vld [vmem:[%s1 + $0x8] sm:$0x1]
    %v15 = vld [vmem:[%s1 + $0x10] sm:$0xff]
    %v16 = vld [vmem:[%s1 + $0x18] sm:$0xff]
    %v17 = vld [vmem:[%s1 + $0x20] sm:$0xff]
    %v18 = vld [vmem:[%s1 + $0x28] sm:$0xff]
    %v19 = vld [vmem:[%s1 + $0x30] sm:$0x1]
    %v20 = vld [vmem:[%s1 + $0x38] sm:$0xff]
    %v21 = vld [vmem:[%s1 + $0x40] sm:$0xff]
    %v22 = vld [vmem:[%s1 + $0x48] sm:$0xff]
    %v23 = vld [vmem:[%s1 + $0x50] sm:$0xff]
    %v24 = vld [vmem:[%s1 + $0x58] sm:$0x1]
    %v25 = vld [vmem:[%s0] sm:$0xff]
    %v26 = vpack.c.bf16 %v25, %v25
    %v27 = vpack.c.bf16 %v13, %v13
    %v28 = vlaneseq
    %v29 = vshrl.u32 %v28, 7
    %v30 = vsub.s32 0, %v29
    %v31 = vrot.slane %v14, %v30
    %vm32 = vcmask 64512
    %v34 = vsel %vm32, %v26, 0
    %vm36 = vcmask 1043456
    %v38 = vsel %vm36, %v27, 0
    %40 = vmatprep.subr.bf16.mxu0 0
    %41 = vmatpush1.bf16.msra.mxu0 %v38
    %42 = vmatprep.subr.bf16.mxu0 0
    %43 = vmatpush1.bf16.msra.mxu0 0
    %44 = vmatprep.subr.bf16.mxu0 0
    %45 = vmatpush1.bf16.msra.mxu0 0
    %46 = vmatprep.subr.bf16.mxu0 0
    %47 = vmatpush1.bf16.msra.mxu0 0
    %48 = vmatprep.subr.bf16.mxu0 0
    %49 = vmatpush1.bf16.msra.mxu0 0
    %50 = vmatprep.subr.bf16.mxu0 0
    %51 = vmatpush1.bf16.msra.mxu0 0
    %52 = vmatprep.subr.bf16.mxu0 0
    %53 = vmatpush1.bf16.msra.mxu0 0
    %54 = vmatprep.subr.bf16.mxu0 0
    %55 = vmatpush1.bf16.msra.mxu0 0
    %56 = vmatprep.subr.bf16.mxu0 0
    %57 = vmatpush1.bf16.msra.mxu0 0
    %58 = vmatprep.subr.bf16.mxu0 0
    %59 = vmatpush1.bf16.msra.mxu0 0
    %60 = vmatprep.subr.bf16.mxu0 0
    %61 = vmatpush1.bf16.msra.mxu0 0
    %62 = vmatprep.subr.bf16.mxu0 0
    %63 = vmatpush1.bf16.msra.mxu0 0
    %64 = vmatprep.subr.bf16.mxu0 0
    %65 = vmatpush1.bf16.msra.mxu0 0
    %66 = vmatprep.subr.bf16.mxu0 0
    %67 = vmatpush1.bf16.msra.mxu0 0
    %68 = vmatprep.subr.bf16.mxu0 0
    %69 = vmatpush1.bf16.msra.mxu0 0
    %70 = vmatprep.subr.bf16.mxu0 0
    %71 = vmatpush1.bf16.msra.mxu0 0
    %72 = vmatprep.mubr.bf16.mxu0 0
    %73 = vmatmul.mubr.bf16.gmra.mrb[0].mxu0 %v34
    %v74 = vpop.f32.mrb[0].mxu0
    %v75 = vadd.f32 %v31, %v74
    %v76 = vpop.f32.mrb[0].mxu0
    %v77 = vpop.f32.mrb[0].mxu0
    %v78 = vpop.f32.mrb[0].mxu0
    %79 = vdwg.mxu0
    %v80 = vmax.f32 %v75, 0.0
    %v81 = vpack.c.bf16 %v80, %v80
    %v82 = vpack.c.bf16 %v16, %v15
    %v83 = vpack.c.bf16 %v18, %v17
    %v84 = vlaneseq
    %v85 = vshrl.u32 %v84, 7
    %v86 = vsub.s32 0, %v85
    %v87 = vrot.slane %v19, %v86
    %vm88 = vcmask 261120
    %v90 = vsel %vm88, %v81, 0
    %92 = vmatprep.subr.bf16.mxu0 0
    %93 = vmatpush1.bf16.msra.mxu0 %v82
    %94 = vmatprep.subr.bf16.mxu0 0
    %95 = vmatpush1.bf16.msra.mxu0 %v83
    %96 = vmatprep.subr.bf16.mxu0 0
    %97 = vmatpush1.bf16.msra.mxu0 0
    %98 = vmatprep.subr.bf16.mxu0 0
    %99 = vmatpush1.bf16.msra.mxu0 0
    %100 = vmatprep.subr.bf16.mxu0 0
    %101 = vmatpush1.bf16.msra.mxu0 0
    %102 = vmatprep.subr.bf16.mxu0 0
    %103 = vmatpush1.bf16.msra.mxu0 0
    %104 = vmatprep.subr.bf16.mxu0 0
    %105 = vmatpush1.bf16.msra.mxu0 0
    %106 = vmatprep.subr.bf16.mxu0 0
    %107 = vmatpush1.bf16.msra.mxu0 0
    %108 = vmatprep.subr.bf16.mxu0 0
    %109 = vmatpush1.bf16.msra.mxu0 0
    %110 = vmatprep.subr.bf16.mxu0 0
    %111 = vmatpush1.bf16.msra.mxu0 0
    %112 = vmatprep.subr.bf16.mxu0 0
    %113 = vmatpush1.bf16.msra.mxu0 0
    %114 = vmatprep.subr.bf16.mxu0 0
    %115 = vmatpush1.bf16.msra.mxu0 0
    %116 = vmatprep.subr.bf16.mxu0 0
    %117 = vmatpush1.bf16.msra.mxu0 0
    %118 = vmatprep.subr.bf16.mxu0 0
    %119 = vmatpush1.bf16.msra.mxu0 0
    %120 = vmatprep.subr.bf16.mxu0 0
    %121 = vmatpush1.bf16.msra.mxu0 0
    %122 = vmatprep.subr.bf16.mxu0 0
    %123 = vmatpush1.bf16.msra.mxu0 0
    %124 = vmatprep.mubr.bf16.mxu0 0
    %125 = vmatmul.mubr.bf16.gmra.mrb[0].mxu0 %v90
    %v126 = vpop.f32.mrb[0].mxu0
    %v127 = vadd.f32 %v87, %v126
    %v128 = vpop.f32.mrb[0].mxu0
    %v129 = vpop.f32.mrb[0].mxu0
    %v130 = vpop.f32.mrb[0].mxu0
    %131 = vdwg.mxu0
    %v132 = vmax.f32 %v127, 0.0
    %v133 = vpack.c.bf16 %v132, %v132
    %v134 = vpack.c.bf16 %v21, %v20
    %v135 = vpack.c.bf16 %v23, %v22
    %v136 = vlaneseq
    %v137 = vshrl.u32 %v136, 7
    %v138 = vsub.s32 0, %v137
    %v139 = vrot.slane %v24, %v138
    %v141 = vsel %vm88, %v133, 0
    %143 = vmatprep.subr.bf16.mxu0 0
    %144 = vmatpush1.bf16.msra.mxu0 %v134
    %145 = vmatprep.subr.bf16.mxu0 0
    %146 = vmatpush1.bf16.msra.mxu0 %v135
    %147 = vmatprep.subr.bf16.mxu0 0
    %148 = vmatpush1.bf16.msra.mxu0 0
    %149 = vmatprep.subr.bf16.mxu0 0
    %150 = vmatpush1.bf16.msra.mxu0 0
    %151 = vmatprep.subr.bf16.mxu0 0
    %152 = vmatpush1.bf16.msra.mxu0 0
    %153 = vmatprep.subr.bf16.mxu0 0
    %154 = vmatpush1.bf16.msra.mxu0 0
    %155 = vmatprep.subr.bf16.mxu0 0
    %156 = vmatpush1.bf16.msra.mxu0 0
    %157 = vmatprep.subr.bf16.mxu0 0
    %158 = vmatpush1.bf16.msra.mxu0 0
    %159 = vmatprep.subr.bf16.mxu0 0
    %160 = vmatpush1.bf16.msra.mxu0 0
    %161 = vmatprep.subr.bf16.mxu0 0
    %162 = vmatpush1.bf16.msra.mxu0 0
    %163 = vmatprep.subr.bf16.mxu0 0
    %164 = vmatpush1.bf16.msra.mxu0 0
    %165 = vmatprep.subr.bf16.mxu0 0
    %166 = vmatpush1.bf16.msra.mxu0 0
    %167 = vmatprep.subr.bf16.mxu0 0
    %168 = vmatpush1.bf16.msra.mxu0 0
    %169 = vmatprep.subr.bf16.mxu0 0
    %170 = vmatpush1.bf16.msra.mxu0 0
    %171 = vmatprep.subr.bf16.mxu0 0
    %172 = vmatpush1.bf16.msra.mxu0 0
    %173 = vmatprep.subr.bf16.mxu0 0
    %174 = vmatpush1.bf16.msra.mxu0 0
    %175 = vmatprep.mubr.bf16.mxu0 0
    %176 = vmatmul.mubr.bf16.gmra.mrb[0].mxu0 %v141
    %v177 = vpop.f32.mrb[0].mxu0
    %v178 = vadd.f32 %v139, %v177
    %v179 = vpop.f32.mrb[0].mxu0
    %v180 = vpop.f32.mrb[0].mxu0
    %v181 = vpop.f32.mrb[0].mxu0
    %182 = vdwg.mxu0
    %v183 = vlaneseq
    %v184 = vand.u32 %v183, 127
    %v185 = vmax.f32 %v178, 1e-06
    %v186 = vmin.f32 %v185, 1.0
    %vm187 = vcmp.lt.s32.totalorder %v184, 4
    %v188 = vsel %vm187, %v178, %v186
    %189 = vst.msk [vmem:[#allocation2] sm:$0xff] %vm32, %v188
    // Predicated region
    $region10: #{tpu_custom_call.1} parent=1 // pred_check
      _
    $region11: #{tpu_custom_call.1} parent=1 // pred_check_branch
      %191 = sbr.rel (0) target = $region13
    $region12: #{tpu_custom_call.1} parent=1 // pred_region
      %s193 = ssub.s32 128, 128
      %194 = vsyncadd [#allocation3], %s193
      %s196 = sshll.u32 [#allocation2], 4
      %s197 = int_to_ptr.vmem [resolvable:$true] %s196
      %199 = dma.vmem_to_hbm [thread:$0]  %s197, 128, %s2, [#allocation3]
    $region13: #{tpu_custom_call.1} parent=1 // pred_fallthru
      _
    // Predicated region
    $region14: #{tpu_custom_call.1} parent=1 // pred_check
      _
    $region15: #{tpu_custom_call.1} parent=1 // pred_check_branch
      %201 = sbr.rel (0) target = $region17
    $region16: #{tpu_custom_call.1} parent=1 // pred_region
      %202 = dma.done [#allocation3], 128
    $region17: #{tpu_custom_call.1} parent=1 // pred_fallthru
      _
    %203 = vsyncpa [#allocation3], 1

</llo_original>
